<compile_context>
chip_gen: v7x
topology: tpu7x:2x2x1
jax: 0.10.0
libtpu: 0.0.40
codegen_flags: <defaults>
</compile_context>

<pallas_src>
import math
from functools import partial

import numpy as np
import jax
import jax.numpy as jnp
from jax.experimental import pallas as pl
from jax.experimental.pallas import tpu as pltpu


# ---------------------------------------------------------------------------
# Kernels (operate on lane-dense 2-D views: x/out/mask (tB, tL), pe (1, tL))
# ---------------------------------------------------------------------------
def _pos_enc_kernel(x_ref, pe_ref, o_ref):
    o_ref[...] = (x_ref[...] + pe_ref[...]).astype(o_ref.dtype)


def _pos_enc_dropout_kernel(x_ref, pe_ref, m_ref, o_ref, *, inv_keep):
    y = x_ref[...] + pe_ref[...]
    keep = m_ref[...] != 0
    o_ref[...] = jnp.where(keep, y * inv_keep, 0.0).astype(o_ref.dtype)


# ---------------------------------------------------------------------------
# Host-side helpers
# ---------------------------------------------------------------------------
def make_positional_encoding(seq_len, d_model):
    """Same buffer the PyTorch module registers (sin on even, cos on odd dims)."""
    position = jnp.arange(seq_len, dtype=jnp.float32)[:, None]
    div_term = jnp.exp(
        jnp.arange(0, d_model, 2, dtype=jnp.float32) * (-math.log(10000.0) / d_model)
    )
    ang = position * div_term                        # (seq_len, d_model // 2)
    pe = jnp.zeros((seq_len, d_model), jnp.float32)
    pe = pe.at[:, 0::2].set(jnp.sin(ang))
    pe = pe.at[:, 1::2].set(jnp.cos(ang))
    return pe


def _vmem_capacity_bytes():
    try:
        if jax.devices()[0].platform == "tpu":
            return int(pltpu.get_tpu_info().vmem_capacity_bytes)
    except Exception:
        pass
    return 64 << 20            # conservative (v7x-sized) fallback


def _choose_tiles(B, L, itemsize, training):
    """VMEM-budget-aware (tB, tL) block choice for the flattened (B, L) view."""
    cap = _vmem_capacity_bytes()
    budget = min(cap // 3, 24 << 20)      # total live block bytes target
    tB = B if B < 8 else 8                # 2nd-minor dim: full extent or mult. of 8
    n_big = 4 + (2 if training else 0)    # x + out (+ mask), each double-buffered

    def live_bytes(tL):
        # big blocks + pe block (also double-buffered)
        return n_big * tB * tL * itemsize + 2 * tL * itemsize

    if L <= 128:
        return tB, L, live_bytes(L)
    tL = 128
    max_tL = min(L, 1 << 16)
    while tL * 2 <= max_tL and live_bytes(tL * 2) <= budget:
        tL *= 2
    return tB, tL, live_bytes(tL)


def positional_encoding(x, pe, *, p=0.0, training=False, key=None, seed=0):
    """Pallas equivalent of PositionalEncoding.forward(x).

    NOTE: in training mode the dropout mask comes from `key` (or `seed`);
    callers must vary it between calls/layers or the same mask is reused.
    """
    B, S, D = x.shape
    S_pe, D_pe = pe.shape
    assert D == D_pe and S <= S_pe

    use_dropout = bool(training) and float(p) > 0.0
    L = S * D
    x2 = x.reshape(B, L)                               # lane-dense view
    pe2 = pe[:S].astype(x.dtype).reshape(1, L)         # self.pe[:, :S, :]

    tB, tL, live = _choose_tiles(B, L, x.dtype.itemsize, use_dropout)
    grid = (pl.cdiv(L, tL), pl.cdiv(B, tB))            # seq*feat outer, batch inner

    x_spec = pl.BlockSpec((tB, tL), lambda l, b: (b, l))
    pe_spec = pl.BlockSpec((1, tL), lambda l, b: (0, l))   # ignores b -> stays resident
    out_spec = pl.BlockSpec((tB, tL), lambda l, b: (b, l))

    cap = _vmem_capacity_bytes()
    vmem_limit = int(min(cap // 2, max(3 * live, 32 << 20)))
    cparams = pltpu.CompilerParams(
        dimension_semantics=("parallel", "parallel"),
        vmem_limit_bytes=vmem_limit,
    )

    out_shape = jax.ShapeDtypeStruct((B, L), x.dtype)

    if not use_dropout:
        out2 = pl.pallas_call(
            _pos_enc_kernel,
            out_shape=out_shape,
            grid=grid,
            in_specs=[x_spec, pe_spec],
            out_specs=out_spec,
            compiler_params=cparams,
        )(x2, pe2)
    else:
        if key is None:
            key = jax.random.PRNGKey(seed)
        keep = jax.random.bernoulli(key, 1.0 - float(p), (B, L)).astype(x.dtype)
        kernel = partial(_pos_enc_dropout_kernel, inv_keep=1.0 / (1.0 - float(p)))
        out2 = pl.pallas_call(
            kernel,
            out_shape=out_shape,
            grid=grid,
            in_specs=[x_spec, pe_spec, x_spec],
            out_specs=out_spec,
            compiler_params=cparams,
        )(x2, pe2, keep)

    return out2.reshape(B, S, D)


if __name__ == "__main__":
    d_model = 32
    seq_len = 8
    batch = 2
    drop_p = 0.1

    key = jax.random.PRNGKey(0)
    k_x, k_drop = jax.random.split(key)
    x = jax.random.normal(k_x, (batch, seq_len, d_model), dtype=jnp.float32)
    pe = make_positional_encoding(seq_len, d_model)
    ref = x + pe[None, :seq_len, :]

    # Eval mode (dropout is identity): must match x + pe.
    out_eval = jax.block_until_ready(
        positional_encoding(x, pe, p=drop_p, training=False))
    assert out_eval.shape == (batch, seq_len, d_model)
    assert jnp.allclose(out_eval, ref, atol=1e-6, rtol=1e-6)

    # Training mode: surviving elements are (x + pe) / (1 - p), dropped are 0.
    out_train = jax.block_until_ready(
        positional_encoding(x, pe, p=drop_p, training=True, key=k_drop))
    out_np = np.asarray(out_train)
    ref_np = np.asarray(ref)
    kept = out_np != 0.0
    assert kept.any()
    assert np.allclose(out_np[kept], (ref_np / (1.0 - drop_p))[kept],
                       atol=1e-5, rtol=1e-5)

    print("KERNEL_OK")
</pallas_src>

<mosaic_0001>
module attributes {stable_mosaic.version = 11 : i64} {
  func.func @_pos_enc_kernel(%arg0: i32, %arg1: i32, %arg2: memref<2x256xf32, #tpu.memory_space<vmem>>, %arg3: memref<1x256xf32, #tpu.memory_space<vmem>>, %arg4: memref<2x256xf32, #tpu.memory_space<vmem>>) attributes {dimension_semantics = [#tpu.dimension_semantics<parallel>, #tpu.dimension_semantics<parallel>], iteration_bounds = array<i64: 1, 1>, scalar_prefetch = 0 : i64, scratch_operands = 0 : i64, tpu.core_type = #tpu.core_type<tc>, window_params = [{transform_indices = @transform_0, window_bounds = array<i64: 2, 256>}, {transform_indices = @transform_1, window_bounds = array<i64: 1, 256>}, {transform_indices = @transform_2, window_bounds = array<i64: 2, 256>}]} {
    %c0 = arith.constant 0 : index
    %c0_0 = arith.constant 0 : index
    %0 = vector.load %arg2[%c0, %c0_0] : memref<2x256xf32, #tpu.memory_space<vmem>>, vector<2x256xf32>
    %c0_1 = arith.constant 0 : index
    %c0_2 = arith.constant 0 : index
    %1 = vector.load %arg3[%c0_1, %c0_2] : memref<1x256xf32, #tpu.memory_space<vmem>>, vector<1x256xf32>
    %2 = vector.broadcast %1 : vector<1x256xf32> to vector<2x256xf32>
    %3 = arith.addf %0, %2 : vector<2x256xf32>
    %c0_3 = arith.constant 0 : index
    %c0_4 = arith.constant 0 : index
    %4 = vector.load %arg4[%c0_3, %c0_4] : memref<2x256xf32, #tpu.memory_space<vmem>>, vector<2x256xf32>
    tpu.vector_store %arg4[%c0_3, %c0_4], %3 {strides = array<i32>} : memref<2x256xf32, #tpu.memory_space<vmem>>, vector<2x256xf32>,
    return
  }
  func.func @transform_0(%arg0: i32, %arg1: i32) -> (i32, i32) {
    %c0_i32 = arith.constant 0 : i32
    return %arg1, %arg0 : i32, i32
  }
  func.func @transform_1(%arg0: i32, %arg1: i32) -> (i32, i32) {
    %c0_i32 = arith.constant 0 : i32
    %c0_i32_0 = arith.constant 0 : i32
    return %c0_i32, %arg0 : i32, i32
  }
  func.func @transform_2(%arg0: i32, %arg1: i32) -> (i32, i32) {
    %c0_i32 = arith.constant 0 : i32
    return %arg1, %arg0 : i32, i32
  }
}

</mosaic_0001>

<llo_original>
// kernel: tpu_custom_call.1
$region0: #{tpu_custom_call.1}
  #allocation0 [shape = 'u32[]', space=smem, size = 0x4, offset = 0x4, fixed_abs, tag = 'smem constant byte address 0x4 - core index']
  #allocation1 [shape = 'u32[144,128]{1,0:T(1,128)}', space=vmem, size = 0x12000, scoped, tag = 'internal scratch']
  %s0 = inlined_call_operand.hbm [shape: f32[2,256], index: 0, kind: input, shape index: {}]
  %s1 = inlined_call_operand.vmem [shape: f32[1,256], index: 1, kind: input, shape index: {}]
  %s2 = inlined_call_operand.hbm [shape: f32[2,256], index: 2, kind: output, shape index: {}]
  %s3 = sld [smem:[#allocation0]]
  $region22: #{tpu_custom_call.1} parent=0
    _
  %s5 = ssub.s32 1, %s3
  %s6 = scalar_select 0, %s5, %s3
  $region1: #{tpu_custom_call.1} parent=0
    #allocation2 [shape = 'u8[2048]{0}', space=vmem, size = 0x800, scoped, tag = 'input window, operand 0, single buffered']
    #allocation3 [shape = 's32[1]{0}', space=sflag, size = 0x4, scoped, tag = 'scoped memory for tpu_custom_call.1']
    #allocation4 [shape = 's32[1]{0}', space=sflag, size = 0x4, scoped, tag = 'scoped memory for tpu_custom_call.1']
    #allocation5 [shape = 'u8[2048]{0}', space=vmem, size = 0x800, scoped, tag = 'output window, operand 0, single buffered']
    %7 = vsyncpa [#allocation3], 0
    %8 = vsyncpa [#allocation4], 0
    // Predicated region
    $region2: #{tpu_custom_call.1} parent=1 // pred_check
      _
    $region3: #{tpu_custom_call.1} parent=1 // pred_check_branch
      %10 = sbr.rel (0) target = $region5
    $region4: #{tpu_custom_call.1} parent=1 // pred_region
      %s12 = ssub.s32 64, 64
      %13 = vsyncadd [#allocation3], %s12
      %s15 = sshll.u32 [#allocation2], 4
      %s16 = int_to_ptr.vmem [resolvable:$true] %s15
      %18 = dma.hbm_to_vmem [thread:$0]  %s0, 64, %s16, [#allocation3]
    $region5: #{tpu_custom_call.1} parent=1 // pred_fallthru
      _
    // Predicated region
    $region6: #{tpu_custom_call.1} parent=1 // pred_check
      _
    $region7: #{tpu_custom_call.1} parent=1 // pred_check_branch
      %20 = sbr.rel (0) target = $region9
    $region8: #{tpu_custom_call.1} parent=1 // pred_region
      _
    $region9: #{tpu_custom_call.1} parent=1 // pred_fallthru
      _
    // Predicated region
    $region10: #{tpu_custom_call.1} parent=1 // pred_check
      _
    $region11: #{tpu_custom_call.1} parent=1 // pred_check_branch
      %22 = sbr.rel (0) target = $region13
    $region12: #{tpu_custom_call.1} parent=1 // pred_region
      %23 = dma.done [#allocation3], 64
    $region13: #{tpu_custom_call.1} parent=1 // pred_fallthru
      _
    %v24 = vld [vmem:[#allocation2] sm:$0xf]
    %v25 = vld [vmem:[%s1] sm:$0x3]
    %v27 = vlaneseq
    %v28 = vshrl.u32 %v27, 7
    %v29 = vsub.s32 0, %v28
    %v30 = vrot.slane %v25, %v29
    %v31 = vlaneseq
    %v32 = vshrl.u32 %v31, 7
    %v33 = vsub.s32 1, %v32
    %v34 = vrot.slane %v25, %v33
    %v35 = vcombine.low %v30, %v34
    %v37 = vunpack.c.l.s4 1983009808
    %v38 = vunpack.c.0.s8 %v37
    %v39 = vlaneseq
    %v40 = vshrl.u32 %v39, 7
    %v41 = vsub.s32 %v38, %v40
    %v42 = vrot.slane %v35, %v41
    %v44 = vadd.f32 %v24, %v42
    %45 = vst [vmem:[#allocation5] sm:$0xf] %v44
    // Predicated region
    $region14: #{tpu_custom_call.1} parent=1 // pred_check
      _
    $region15: #{tpu_custom_call.1} parent=1 // pred_check_branch
      %47 = sbr.rel (0) target = $region17
    $region16: #{tpu_custom_call.1} parent=1 // pred_region
      %s49 = ssub.s32 64, 64
      %50 = vsyncadd [#allocation4], %s49
      %s52 = sshll.u32 [#allocation5], 4
      %s53 = int_to_ptr.vmem [resolvable:$true] %s52
      %55 = dma.vmem_to_hbm [thread:$0]  %s53, 64, %s2, [#allocation4]
    $region17: #{tpu_custom_call.1} parent=1 // pred_fallthru
      _
    // Predicated region
    $region18: #{tpu_custom_call.1} parent=1 // pred_check
      _
    $region19: #{tpu_custom_call.1} parent=1 // pred_check_branch
      %57 = sbr.rel (0) target = $region21
    $region20: #{tpu_custom_call.1} parent=1 // pred_region
      %58 = dma.done [#allocation4], 64
    $region21: #{tpu_custom_call.1} parent=1 // pred_fallthru
      _
    %59 = vsyncpa [#allocation3], 1
    %60 = vsyncpa [#allocation4], 1

</llo_original>
